<compile_context>
chip_gen: v6e
topology: v6e:2x2x1
jax: 0.10.0
libtpu: 0.0.40
codegen_flags: <defaults>
</compile_context>

<pallas_src>
import jax
import jax.numpy as jnp
from jax import lax
from jax.experimental import pallas as pl
from jax.experimental.pallas import tpu as pltpu


def _make_kernel(n_chunks, cw):
    """Build the kernel body closed over the static lane-chunk layout.

    x_ref : (nb*C_in,  n_chunks*cw)  streamed input block (lane-dense)
    a_ref : (cw, cw)                 kron(I_{cw//V}, A)   (resident)
    w_ref : (nb*C_out, nb*C_in)      kron(I_nb, W)        (resident)
    b_ref : (nb*C_out, 1)            tiled conv bias      (resident)
    o_ref : (nb*C_out, n_chunks*cw)  output block (lane-dense)
    """

    def chunk(x_c, a, w, b):
        # Graph matmul over V on a lane-aligned chunk (block-diagonal A).
        z = jnp.dot(x_c, a, preferred_element_type=jnp.float32)
        # 1x1 channel conv for all nb samples at once (block-diagonal W) + bias.
        y = jnp.dot(w, z, preferred_element_type=jnp.float32) + b
        return jnp.maximum(y, 0.0)

    if n_chunks <= 8:
        def kernel(x_ref, a_ref, w_ref, b_ref, o_ref):
            a = a_ref[...]
            w = w_ref[...]
            b = b_ref[...]
            for j in range(n_chunks):                 # small static unroll
                lo, hi = j * cw, (j + 1) * cw          # tile-aligned slices
                o_ref[:, lo:hi] = chunk(x_ref[:, lo:hi], a, w, b).astype(o_ref.dtype)
    else:
        def kernel(x_ref, a_ref, w_ref, b_ref, o_ref):
            a = a_ref[...]
            w = w_ref[...]
            b = b_ref[...]

            def body(j, carry):
                off = pl.multiple_of(j * cw, cw)
                o_ref[:, pl.ds(off, cw)] = chunk(
                    x_ref[:, pl.ds(off, cw)], a, w, b).astype(o_ref.dtype)
                return carry

            lax.fori_loop(0, n_chunks, body, 0)

    return kernel


def _vmem_bytes(nb, c_in, c_out, tv, cw, itemsize):
    streamed = 2 * (nb * c_in * tv + nb * c_out * tv)            # double-buffered
    resident = 2 * (cw * cw + (nb * c_out) * (nb * c_in) + nb * c_out)
    return (streamed + resident) * itemsize


def _pick_block_n(n, c_in, c_out, tv, cw, itemsize, max_nb, budget_bytes):
    """Largest legal batch-block; prefer nb*C_in <= 128 and grid length >= 2."""

    def legal(nb):
        if n % nb:
            return False
        # (8, 128) rule on the 2-D blocks: sublane dims must be mult-of-8
        # unless the block equals the full array (nb == n).
        if nb != n and ((nb * c_in) % 8 or (nb * c_out) % 8):
            return False
        return _vmem_bytes(nb, c_in, c_out, tv, cw, itemsize) <= budget_bytes

    cands = [d for d in range(1, min(max_nb, n) + 1) if legal(d)]
    if not cands:
        return n                                     # full batch is always legal

    def score(nb):
        k_ok = nb * c_in <= 128        # channel matmul stays within one K tile
        multi = (n // nb) >= 2         # >= 2 grid steps keeps both v7x TCs busy
        return (k_ok and multi, k_ok, multi, nb)

    return max(cands, key=score)


def graph_convolution(x, A, W, b, *, max_block_n=8):
    """Pallas forward of GraphConvolution.

    x:(N,C_in,T,V)  A:(V,V)  W:(C_out,C_in)  b:(C_out,)  ->  (N,C_out,T,V)
    """
    N, C_in, T, V = x.shape
    C_out = W.shape[0]
    TV = T * V
    itemsize = jnp.dtype(x.dtype).itemsize

    # Lane-chunk width: 128 when the T*V axis is 128-aligned (zero MXU tile
    # waste, tiny operator); otherwise one block-diag operator over all of T*V.
    if TV % 128 == 0 and 128 % V == 0:
        cw = 128
    else:
        cw = TV
    n_chunks = TV // cw

    nb = _pick_block_n(N, C_in, C_out, TV, cw, itemsize, max_block_n,
                       budget_bytes=12 * 1024 * 1024)
    grid = (N // nb,)

    # Wrapper-side reshapes are contiguous (free). Kernel sees 2-D lane-dense slabs.
    x2 = x.reshape(N * C_in, TV)
    a_op = jnp.kron(jnp.eye(cw // V, dtype=A.dtype), A)      # (cw, cw)
    wblk = jnp.kron(jnp.eye(nb, dtype=W.dtype), W)           # (nb*C_out, nb*C_in)
    bblk = jnp.tile(b, nb).reshape(nb * C_out, 1)            # (nb*C_out, 1)

    est = _vmem_bytes(nb, C_in, C_out, TV, cw, itemsize)
    vmem_limit = int(min(32 * 1024 * 1024, max(8 * 1024 * 1024, 2 * est)))

    resident = lambda n: (0, 0)
    kernel = _make_kernel(n_chunks, cw)

    out2 = pl.pallas_call(
        kernel,
        out_shape=jax.ShapeDtypeStruct((N * C_out, TV), x.dtype),
        grid_spec=pltpu.PrefetchScalarGridSpec(
            num_scalar_prefetch=0,
            grid=grid,
            in_specs=[
                pl.BlockSpec((nb * C_in, TV), lambda n: (n, 0)),
                pl.BlockSpec((cw, cw), resident),
                pl.BlockSpec((nb * C_out, nb * C_in), resident),
                pl.BlockSpec((nb * C_out, 1), resident),
            ],
            out_specs=pl.BlockSpec((nb * C_out, TV), lambda n: (n, 0)),
        ),
        compiler_params=pltpu.CompilerParams(
            dimension_semantics=("parallel",),
            vmem_limit_bytes=vmem_limit,
        ),
    )(x2, a_op, wblk, bblk)

    # Free contiguous reshape back to the module's (N, C_out, T, V) output.
    return out2.reshape(N, C_out, T, V)


def graph_convolution_reference(x, A, W, b):
    """Plain-JAX mirror of the PyTorch GraphConvolution.forward."""
    z = jnp.einsum('nctv,vw->nctw', x, A)
    y = jnp.einsum('oc,nctw->notw', W, z) + b[None, :, None, None]
    return jnp.maximum(y, 0.0)


if __name__ == "__main__":
    key = jax.random.PRNGKey(0)

    def make_inputs(k, N, C_in, C_out, T, V):
        ks = jax.random.split(k, 4)
        x = jax.random.normal(ks[0], (N, C_in, T, V), dtype=jnp.float32)
        A = jax.random.normal(ks[1], (V, V), dtype=jnp.float32) * 0.1
        W = jax.random.normal(ks[2], (C_out, C_in), dtype=jnp.float32) * 0.3
        b = jax.random.normal(ks[3], (C_out,), dtype=jnp.float32) * 0.1
        return x, A, W, b

    # Shapes implied by the module: x:(N, C, T, V), A:(V, V), 1x1 conv C_in->C_out.
    #  * case 1: small batch, 2 lane chunks
    #  * case 2: multi-step batch grid (nb=4 -> grid length 2), 2 lane chunks
    #  * case 3: nb=1, single lane chunk (TV == 128)
    for (N, C_in, C_out, T, V) in [(2, 4, 16, 16, 16),
                                   (8, 4, 16, 16, 16),
                                   (2, 8, 8, 8, 16)]:
        key, sub = jax.random.split(key)
        x, A, W, b = make_inputs(sub, N, C_in, C_out, T, V)

        out = jax.block_until_ready(graph_convolution(x, A, W, b))
        ref = graph_convolution_reference(x, A, W, b)

        assert out.shape == (N, C_out, T, V)
        assert jnp.allclose(out, ref, atol=1e-4, rtol=1e-4), \
            f"mismatch vs reference at N={N}, C_in={C_in}, C_out={C_out}, T={T}, V={V}"

    print("KERNEL_OK")
</pallas_src>

<mosaic_0001>
module attributes {stable_mosaic.version = 11 : i64} {
  func.func @kernel(%arg0: i32, %arg1: memref<8x256xf32, #tpu.memory_space<vmem>>, %arg2: memref<128x128xf32, #tpu.memory_space<vmem>>, %arg3: memref<32x8xf32, #tpu.memory_space<vmem>>, %arg4: memref<32x1xf32, #tpu.memory_space<vmem>>, %arg5: memref<32x256xf32, #tpu.memory_space<vmem>>) attributes {dimension_semantics = [#tpu.dimension_semantics<parallel>], iteration_bounds = array<i64: 1>, scalar_prefetch = 0 : i64, scratch_operands = 0 : i64, tpu.core_type = #tpu.core_type<tc>, window_params = [{transform_indices = @transform_0, window_bounds = array<i64: 8, 256>}, {pipeline_mode = #tpu.pipeline_mode<synchronous>, transform_indices = @transform_1, window_bounds = array<i64: 128, 128>}, {pipeline_mode = #tpu.pipeline_mode<synchronous>, transform_indices = @transform_2, window_bounds = array<i64: 32, 8>}, {pipeline_mode = #tpu.pipeline_mode<synchronous>, transform_indices = @transform_3, window_bounds = array<i64: 32, 1>}, {transform_indices = @transform_4, window_bounds = array<i64: 32, 256>}]} {
    %c0 = arith.constant 0 : index
    %c0_0 = arith.constant 0 : index
    %0 = vector.load %arg2[%c0, %c0_0] : memref<128x128xf32, #tpu.memory_space<vmem>>, vector<128x128xf32>
    %c0_1 = arith.constant 0 : index
    %c0_2 = arith.constant 0 : index
    %1 = vector.load %arg3[%c0_1, %c0_2] : memref<32x8xf32, #tpu.memory_space<vmem>>, vector<32x8xf32>
    %c0_3 = arith.constant 0 : index
    %c0_4 = arith.constant 0 : index
    %2 = vector.load %arg4[%c0_3, %c0_4] : memref<32x1xf32, #tpu.memory_space<vmem>>, vector<32x1xf32>
    %c0_5 = arith.constant 0 : index
    %c0_6 = arith.constant 0 : index
    %3 = vector.load %arg1[%c0_5, %c0_6] : memref<8x256xf32, #tpu.memory_space<vmem>>, vector<8x128xf32>
    %cst = arith.constant dense<0.000000e+00> : vector<8x128xf32>
    %4 = tpu.matmul %3, %0, %cst {dimension_numbers = #tpu.dot_dimension_numbers<[1], [0], [0], [1], [0, 0, 1, 1], [], []>} : vector<8x128xf32>, vector<128x128xf32>, vector<8x128xf32> -> vector<8x128xf32>
    %cst_7 = arith.constant dense<0.000000e+00> : vector<32x128xf32>
    %5 = tpu.matmul %1, %4, %cst_7 {dimension_numbers = #tpu.dot_dimension_numbers<[1], [0], [0], [1], [0, 0, 1, 1], [], []>} : vector<32x8xf32>, vector<8x128xf32>, vector<32x128xf32> -> vector<32x128xf32>
    %6 = vector.broadcast %2 : vector<32x1xf32> to vector<32x128xf32>
    %7 = arith.addf %5, %6 : vector<32x128xf32>
    %cst_8 = arith.constant 0.000000e+00 : f32
    %8 = vector.broadcast %cst_8 : f32 to vector<32x128xf32>
    %9 = arith.maximumf %7, %8 : vector<32x128xf32>
    %c0_9 = arith.constant 0 : index
    %c0_10 = arith.constant 0 : index
    %10 = vector.load %arg5[%c0_9, %c0_10] : memref<32x256xf32, #tpu.memory_space<vmem>>, vector<32x128xf32>
    tpu.vector_store %arg5[%c0_9, %c0_10], %9 {strides = array<i32>} : memref<32x256xf32, #tpu.memory_space<vmem>>, vector<32x128xf32>,
    %c0_11 = arith.constant 0 : index
    %c128 = arith.constant 128 : index
    %11 = vector.load %arg1[%c0_11, %c128] : memref<8x256xf32, #tpu.memory_space<vmem>>, vector<8x128xf32>
    %cst_12 = arith.constant dense<0.000000e+00> : vector<8x128xf32>
    %12 = tpu.matmul %11, %0, %cst_12 {dimension_numbers = #tpu.dot_dimension_numbers<[1], [0], [0], [1], [0, 0, 1, 1], [], []>} : vector<8x128xf32>, vector<128x128xf32>, vector<8x128xf32> -> vector<8x128xf32>
    %cst_13 = arith.constant dense<0.000000e+00> : vector<32x128xf32>
    %13 = tpu.matmul %1, %12, %cst_13 {dimension_numbers = #tpu.dot_dimension_numbers<[1], [0], [0], [1], [0, 0, 1, 1], [], []>} : vector<32x8xf32>, vector<8x128xf32>, vector<32x128xf32> -> vector<32x128xf32>
    %14 = vector.broadcast %2 : vector<32x1xf32> to vector<32x128xf32>
    %15 = arith.addf %13, %14 : vector<32x128xf32>
    %cst_14 = arith.constant 0.000000e+00 : f32
    %16 = vector.broadcast %cst_14 : f32 to vector<32x128xf32>
    %17 = arith.maximumf %15, %16 : vector<32x128xf32>
    %c0_15 = arith.constant 0 : index
    %c128_16 = arith.constant 128 : index
    %18 = vector.load %arg5[%c0_15, %c128_16] : memref<32x256xf32, #tpu.memory_space<vmem>>, vector<32x128xf32>
    tpu.vector_store %arg5[%c0_15, %c128_16], %17 {strides = array<i32>} : memref<32x256xf32, #tpu.memory_space<vmem>>, vector<32x128xf32>,
    return
  }
  func.func @transform_0(%arg0: i32) -> (i32, i32) {
    %c0_i32 = arith.constant 0 : i32
    %c0_i32_0 = arith.constant 0 : i32
    return %arg0, %c0_i32 : i32, i32
  }
  func.func @transform_1(%arg0: i32) -> (i32, i32) {
    %c0_i32 = arith.constant 0 : i32
    %c0_i32_0 = arith.constant 0 : i32
    %c0_i32_1 = arith.constant 0 : i32
    return %c0_i32, %c0_i32_0 : i32, i32
  }
  func.func @transform_2(%arg0: i32) -> (i32, i32) {
    %c0_i32 = arith.constant 0 : i32
    %c0_i32_0 = arith.constant 0 : i32
    %c0_i32_1 = arith.constant 0 : i32
    return %c0_i32, %c0_i32_0 : i32, i32
  }
  func.func @transform_3(%arg0: i32) -> (i32, i32) {
    %c0_i32 = arith.constant 0 : i32
    %c0_i32_0 = arith.constant 0 : i32
    %c0_i32_1 = arith.constant 0 : i32
    return %c0_i32, %c0_i32_0 : i32, i32
  }
  func.func @transform_4(%arg0: i32) -> (i32, i32) {
    %c0_i32 = arith.constant 0 : i32
    %c0_i32_0 = arith.constant 0 : i32
    return %arg0, %c0_i32 : i32, i32
  }
}

</mosaic_0001>

<llo_original>
// kernel: tpu_custom_call.1
$region0: #{tpu_custom_call.1}
  #allocation0 [shape = 'u32[]', space=smem, size = 0x4, offset = 0x4, fixed_abs, tag = 'smem constant byte address 0x4 - core index']
  #allocation1 [shape = 'u32[144,128]{1,0:T(1,128)}', space=vmem, size = 0x12000, scoped, tag = 'internal scratch']
  %s0 = inlined_call_operand.vmem [shape: f32[8,256], index: 0, kind: input, shape index: {}]
  %s1 = inlined_call_operand.hbm [shape: f32[128,128], index: 1, kind: input, shape index: {}]
  %s2 = inlined_call_operand.vmem [shape: f32[32,8], index: 2, kind: input, shape index: {}]
  %s3 = inlined_call_operand.vmem [shape: f32[32,1], index: 3, kind: input, shape index: {}]
  %s4 = inlined_call_operand.hbm [shape: f32[32,256], index: 4, kind: output, shape index: {}]
  %s5 = sld [smem:[#allocation0]]
  $region30: #{tpu_custom_call.1} parent=0
    _
  %s7 = ssub.s32 1, %s5
  %s8 = scalar_select 0, %s7, %s5
  $region1: #{tpu_custom_call.1} parent=0
    #allocation2 [shape = 'u8[65536]{0}', space=vmem, size = 0x10000, scoped, tag = 'input window, operand 1, single buffered']
    #allocation3 [shape = 's32[1]{0}', space=sflag, size = 0x4, scoped, tag = 'scoped memory for tpu_custom_call.1']
    #allocation4 [shape = 's32[1]{0}', space=sflag, size = 0x4, scoped, tag = 'scoped memory for tpu_custom_call.1']
    #allocation5 [shape = 'u8[32768]{0}', space=vmem, size = 0x8000, scoped, tag = 'output window, operand 0, single buffered']
    %9 = vsyncpa [#allocation3], 0
    %10 = vsyncpa [#allocation4], 0
    // Predicated region
    $region2: #{tpu_custom_call.1} parent=1 // pred_check
      _
    $region3: #{tpu_custom_call.1} parent=1 // pred_check_branch
      %12 = sbr.rel (0) target = $region5
    $region4: #{tpu_custom_call.1} parent=1 // pred_region
      _
    $region5: #{tpu_custom_call.1} parent=1 // pred_fallthru
      _
    // Predicated region
    $region6: #{tpu_custom_call.1} parent=1 // pred_check
      _
    $region7: #{tpu_custom_call.1} parent=1 // pred_check_branch
      %14 = sbr.rel (0) target = $region9
    $region8: #{tpu_custom_call.1} parent=1 // pred_region
      %s16 = ssub.s32 2048, 2048
      %17 = vsyncadd [#allocation3], %s16
      %s18 = sshll.u32 [#allocation2], 4
      %s19 = int_to_ptr.vmem [resolvable:$true] %s18
      %24 = dma.hbm_to_vmem [thread:$0]  %s1, 2048, %s19, [#allocation3], 128, 128, 8
    $region9: #{tpu_custom_call.1} parent=1 // pred_fallthru
      _
    // Predicated region
    $region10: #{tpu_custom_call.1} parent=1 // pred_check
      _
    $region11: #{tpu_custom_call.1} parent=1 // pred_check_branch
      %26 = sbr.rel (0) target = $region13
    $region12: #{tpu_custom_call.1} parent=1 // pred_region
      _
    $region13: #{tpu_custom_call.1} parent=1 // pred_fallthru
      _
    // Predicated region
    $region14: #{tpu_custom_call.1} parent=1 // pred_check
      _
    $region15: #{tpu_custom_call.1} parent=1 // pred_check_branch
      %28 = sbr.rel (0) target = $region17
    $region16: #{tpu_custom_call.1} parent=1 // pred_region
      _
    $region17: #{tpu_custom_call.1} parent=1 // pred_fallthru
      _
    // Predicated region
    $region18: #{tpu_custom_call.1} parent=1 // pred_check
      _
    $region19: #{tpu_custom_call.1} parent=1 // pred_check_branch
      %30 = sbr.rel (0) target = $region21
    $region20: #{tpu_custom_call.1} parent=1 // pred_region
      %31 = dma.done [#allocation3], 2048
    $region21: #{tpu_custom_call.1} parent=1 // pred_fallthru
      _
    %v32 = vld [vmem:[#allocation2] sm:$0xff]
    %v33 = vld [vmem:[#allocation2 + $0x8] sm:$0xff]
    %v34 = vld [vmem:[#allocation2 + $0x10] sm:$0xff]
    %v35 = vld [vmem:[#allocation2 + $0x18] sm:$0xff]
    %v36 = vld [vmem:[#allocation2 + $0x20] sm:$0xff]
    %v37 = vld [vmem:[#allocation2 + $0x28] sm:$0xff]
    %v38 = vld [vmem:[#allocation2 + $0x30] sm:$0xff]
    %v39 = vld [vmem:[#allocation2 + $0x38] sm:$0xff]
    %v40 = vld [vmem:[#allocation2 + $0x40] sm:$0xff]
    %v41 = vld [vmem:[#allocation2 + $0x48] sm:$0xff]
    %v42 = vld [vmem:[#allocation2 + $0x50] sm:$0xff]
    %v43 = vld [vmem:[#allocation2 + $0x58] sm:$0xff]
    %v44 = vld [vmem:[#allocation2 + $0x60] sm:$0xff]
    %v45 = vld [vmem:[#allocation2 + $0x68] sm:$0xff]
    %v46 = vld [vmem:[#allocation2 + $0x70] sm:$0xff]
    %v47 = vld [vmem:[#allocation2 + $0x78] sm:$0xff]
    %v48 = vld [vmem:[%s2] sm:$0xff]
    %v49 = vld [vmem:[%s2 + $0x8] sm:$0xff]
    %v50 = vld [vmem:[%s2 + $0x10] sm:$0xff]
    %v51 = vld [vmem:[%s2 + $0x18] sm:$0xff]
    %v52 = vld [vmem:[%s3] sm:$0xff]
    %v53 = vld [vmem:[%s3 + $0x8] sm:$0xff]
    %v54 = vld [vmem:[%s3 + $0x10] sm:$0xff]
    %v55 = vld [vmem:[%s3 + $0x18] sm:$0xff]
    %v56 = vld [vmem:[%s0] sm:$0xff]
    %57 = vmatprep.subr.mxu0 0.0
    %58 = vmatpush1.msra.mxu0 %v47
    %59 = vmatprep.subr.mxu0 0.0
    %60 = vmatpush1.msra.mxu0 %v46
    %61 = vmatprep.subr.mxu0 0.0
    %62 = vmatpush1.msra.mxu0 %v45
    %63 = vmatprep.subr.mxu0 0.0
    %64 = vmatpush1.msra.mxu0 %v44
    %65 = vmatprep.subr.mxu0 0.0
    %66 = vmatpush1.msra.mxu0 %v43
    %67 = vmatprep.subr.mxu0 0.0
    %68 = vmatpush1.msra.mxu0 %v42
    %69 = vmatprep.subr.mxu0 0.0
    %70 = vmatpush1.msra.mxu0 %v41
    %71 = vmatprep.subr.mxu0 0.0
    %72 = vmatpush1.msra.mxu0 %v40
    %73 = vmatprep.subr.mxu0 0.0
    %74 = vmatpush1.msra.mxu0 %v39
    %75 = vmatprep.subr.mxu0 0.0
    %76 = vmatpush1.msra.mxu0 %v38
    %77 = vmatprep.subr.mxu0 0.0
    %78 = vmatpush1.msra.mxu0 %v37
    %79 = vmatprep.subr.mxu0 0.0
    %80 = vmatpush1.msra.mxu0 %v36
    %81 = vmatprep.subr.mxu0 0.0
    %82 = vmatpush1.msra.mxu0 %v35
    %83 = vmatprep.subr.mxu0 0.0
    %84 = vmatpush1.msra.mxu0 %v34
    %85 = vmatprep.subr.mxu0 0.0
    %86 = vmatpush1.msra.mxu0 %v33
    %87 = vmatprep.subr.mxu0 0.0
    %88 = vmatpush1.msra.mxu0 %v32
    %89 = vmatprep.subr.mxu0 0.0
    %90 = vmatpush2.msra.mxu0 0.0
    %91 = vmatprep.subr.mxu0 0.0
    %92 = vmatpush2.msra.mxu0 0.0
    %93 = vmatprep.subr.mxu0 0.0
    %94 = vmatpush2.msra.mxu0 0.0
    %95 = vmatprep.subr.mxu0 0.0
    %96 = vmatpush2.msra.mxu0 0.0
    %97 = vmatprep.subr.mxu0 0.0
    %98 = vmatpush2.msra.mxu0 0.0
    %99 = vmatprep.subr.mxu0 0.0
    %100 = vmatpush2.msra.mxu0 0.0
    %101 = vmatprep.subr.mxu0 0.0
    %102 = vmatpush2.msra.mxu0 0.0
    %103 = vmatprep.subr.mxu0 0.0
    %104 = vmatpush2.msra.mxu0 0.0
    %105 = vmatprep.subr.mxu0 0.0
    %106 = vmatpush2.msra.mxu0 0.0
    %107 = vmatprep.subr.mxu0 0.0
    %108 = vmatpush2.msra.mxu0 0.0
    %109 = vmatprep.subr.mxu0 0.0
    %110 = vmatpush2.msra.mxu0 0.0
    %111 = vmatprep.subr.mxu0 0.0
    %112 = vmatpush2.msra.mxu0 0.0
    %113 = vmatprep.subr.mxu0 0.0
    %114 = vmatpush2.msra.mxu0 0.0
    %115 = vmatprep.subr.mxu0 0.0
    %116 = vmatpush2.msra.mxu0 0.0
    %117 = vmatprep.subr.mxu0 0.0
    %118 = vmatpush2.msra.mxu0 0.0
    %119 = vmatprep.subr.mxu0 0.0
    %120 = vmatpush2.msra.mxu0 0.0
    %121 = vmatprep.mubr.f32.mxu0 0.0
    %122 = vmatmul.mubr.f32.gmra.mxu0 %v56
    %v123 = vpop.f32.mrf.mxu0
    %v124 = vadd.f32 0.0, %v123
    %v125 = vpop.f32.mrf.mxu0
    %126 = vdwg.mxu0
    %128 = vset.pattern.permute.xlu0 0
    %129 = vperm.xlu0 %128, %v52
    %v130 = vpop.permute.xlu0 %129
    %133 = vset.pattern.permute.xlu0 0
    %134 = vperm.xlu0 %133, %v53
    %v135 = vpop.permute.xlu0 %134
    %138 = vset.pattern.permute.xlu0 0
    %139 = vperm.xlu0 %138, %v54
    %v140 = vpop.permute.xlu0 %139
    %143 = vset.pattern.permute.xlu0 0
    %144 = vperm.xlu0 %143, %v55
    %v145 = vpop.permute.xlu0 %144
    %vm147 = vcmask 64512
    %v149 = vsel %vm147, %v48, 0
    %v152 = vsel %vm147, %v49, 0
    %v155 = vsel %vm147, %v50, 0
    %v158 = vsel %vm147, %v51, 0
    %160 = vmatprep.subr.mxu0 0.0
    %161 = vmatpush1.msra.mxu0 0.0
    %162 = vmatprep.subr.mxu0 0.0
    %163 = vmatpush1.msra.mxu0 0.0
    %164 = vmatprep.subr.mxu0 0.0
    %165 = vmatpush1.msra.mxu0 0.0
    %166 = vmatprep.subr.mxu0 0.0
    %167 = vmatpush1.msra.mxu0 0.0
    %168 = vmatprep.subr.mxu0 0.0
    %169 = vmatpush1.msra.mxu0 0.0
    %170 = vmatprep.subr.mxu0 0.0
    %171 = vmatpush1.msra.mxu0 0.0
    %172 = vmatprep.subr.mxu0 0.0
    %173 = vmatpush1.msra.mxu0 0.0
    %174 = vmatprep.subr.mxu0 0.0
    %175 = vmatpush1.msra.mxu0 0.0
    %176 = vmatprep.subr.mxu0 0.0
    %177 = vmatpush1.msra.mxu0 0.0
    %178 = vmatprep.subr.mxu0 0.0
    %179 = vmatpush1.msra.mxu0 0.0
    %180 = vmatprep.subr.mxu0 0.0
    %181 = vmatpush1.msra.mxu0 0.0
    %182 = vmatprep.subr.mxu0 0.0
    %183 = vmatpush1.msra.mxu0 0.0
    %184 = vmatprep.subr.mxu0 0.0
    %185 = vmatpush1.msra.mxu0 0.0
    %186 = vmatprep.subr.mxu0 0.0
    %187 = vmatpush1.msra.mxu0 0.0
    %188 = vmatprep.subr.mxu0 0.0
    %189 = vmatpush1.msra.mxu0 0.0
    %190 = vmatprep.subr.mxu0 0.0
    %191 = vmatpush1.msra.mxu0 %v124
    %192 = vmatprep.subr.mxu0 0.0
    %193 = vmatpush2.msra.mxu0 0.0
    %194 = vmatprep.subr.mxu0 0.0
    %195 = vmatpush2.msra.mxu0 0.0
    %196 = vmatprep.subr.mxu0 0.0
    %197 = vmatpush2.msra.mxu0 0.0
    %198 = vmatprep.subr.mxu0 0.0
    %199 = vmatpush2.msra.mxu0 0.0
    %200 = vmatprep.subr.mxu0 0.0
    %201 = vmatpush2.msra.mxu0 0.0
    %202 = vmatprep.subr.mxu0 0.0
    %203 = vmatpush2.msra.mxu0 0.0
    %204 = vmatprep.subr.mxu0 0.0
    %205 = vmatpush2.msra.mxu0 0.0
    %206 = vmatprep.subr.mxu0 0.0
    %207 = vmatpush2.msra.mxu0 0.0
    %208 = vmatprep.subr.mxu0 0.0
    %209 = vmatpush2.msra.mxu0 0.0
    %210 = vmatprep.subr.mxu0 0.0
    %211 = vmatpush2.msra.mxu0 0.0
    %212 = vmatprep.subr.mxu0 0.0
    %213 = vmatpush2.msra.mxu0 0.0
    %214 = vmatprep.subr.mxu0 0.0
    %215 = vmatpush2.msra.mxu0 0.0
    %216 = vmatprep.subr.mxu0 0.0
    %217 = vmatpush2.msra.mxu0 0.0
    %218 = vmatprep.subr.mxu0 0.0
    %219 = vmatpush2.msra.mxu0 0.0
    %220 = vmatprep.subr.mxu0 0.0
    %221 = vmatpush2.msra.mxu0 0.0
    %222 = vmatprep.subr.mxu0 0.0
    %223 = vmatpush2.msra.mxu0 0.0
    %224 = vmatprep.mubr.f32.mxu0 0.0
    %225 = vmatmul.mubr.f32.gmra.mxu0 %v149
    %v226 = vpop.f32.mrf.mxu0
    %v227 = vadd.f32 %v130, %v226
    %v228 = vpop.f32.mrf.mxu0
    %229 = vmatprep.mubr.f32.mxu0 0.0
    %230 = vmatmul.mubr.f32.gmra.mxu0 %v152
    %v231 = vpop.f32.mrf.mxu0
    %v232 = vadd.f32 %v135, %v231
    %v233 = vpop.f32.mrf.mxu0
    %234 = vmatprep.mubr.f32.mxu0 0.0
    %235 = vmatmul.mubr.f32.gmra.mxu0 %v155
    %v236 = vpop.f32.mrf.mxu0
    %v237 = vadd.f32 %v140, %v236
    %v238 = vpop.f32.mrf.mxu0
    %239 = vmatprep.mubr.f32.mxu0 0.0
    %240 = vmatmul.mubr.f32.gmra.mxu0 %v158
    %v241 = vpop.f32.mrf.mxu0
    %v242 = vadd.f32 %v145, %v241
    %v243 = vpop.f32.mrf.mxu0
    %244 = vdwg.mxu0
    %v245 = vmax.f32 %v227, 0.0
    %v246 = vmax.f32 %v232, 0.0
    %v247 = vmax.f32 %v237, 0.0
    %v248 = vmax.f32 %v242, 0.0
    %249 = vst [vmem:[#allocation5] sm:$0xff] %v245
    %250 = vst [vmem:[#allocation5 + $0x10] sm:$0xff] %v246
    %251 = vst [vmem:[#allocation5 + $0x20] sm:$0xff] %v247
    %252 = vst [vmem:[#allocation5 + $0x30] sm:$0xff] %v248
    %v253 = vld [vmem:[%s0 + $0x8] sm:$0xff]
    %254 = vmatprep.subr.mxu0 0.0
    %255 = vmatpush1.msra.mxu0 %v47
    %256 = vmatprep.subr.mxu0 0.0
    %257 = vmatpush1.msra.mxu0 %v46
    %258 = vmatprep.subr.mxu0 0.0
    %259 = vmatpush1.msra.mxu0 %v45
    %260 = vmatprep.subr.mxu0 0.0
    %261 = vmatpush1.msra.mxu0 %v44
    %262 = vmatprep.subr.mxu0 0.0
    %263 = vmatpush1.msra.mxu0 %v43
    %264 = vmatprep.subr.mxu0 0.0
    %265 = vmatpush1.msra.mxu0 %v42
    %266 = vmatprep.subr.mxu0 0.0
    %267 = vmatpush1.msra.mxu0 %v41
    %268 = vmatprep.subr.mxu0 0.0
    %269 = vmatpush1.msra.mxu0 %v40
    %270 = vmatprep.subr.mxu0 0.0
    %271 = vmatpush1.msra.mxu0 %v39
    %272 = vmatprep.subr.mxu0 0.0
    %273 = vmatpush1.msra.mxu0 %v38
    %274 = vmatprep.subr.mxu0 0.0
    %275 = vmatpush1.msra.mxu0 %v37
    %276 = vmatprep.subr.mxu0 0.0
    %277 = vmatpush1.msra.mxu0 %v36
    %278 = vmatprep.subr.mxu0 0.0
    %279 = vmatpush1.msra.mxu0 %v35
    %280 = vmatprep.subr.mxu0 0.0
    %281 = vmatpush1.msra.mxu0 %v34
    %282 = vmatprep.subr.mxu0 0.0
    %283 = vmatpush1.msra.mxu0 %v33
    %284 = vmatprep.subr.mxu0 0.0
    %285 = vmatpush1.msra.mxu0 %v32
    %286 = vmatprep.subr.mxu0 0.0
    %287 = vmatpush2.msra.mxu0 0.0
    %288 = vmatprep.subr.mxu0 0.0
    %289 = vmatpush2.msra.mxu0 0.0
    %290 = vmatprep.subr.mxu0 0.0
    %291 = vmatpush2.msra.mxu0 0.0
    %292 = vmatprep.subr.mxu0 0.0
    %293 = vmatpush2.msra.mxu0 0.0
    %294 = vmatprep.subr.mxu0 0.0
    %295 = vmatpush2.msra.mxu0 0.0
    %296 = vmatprep.subr.mxu0 0.0
    %297 = vmatpush2.msra.mxu0 0.0
    %298 = vmatprep.subr.mxu0 0.0
    %299 = vmatpush2.msra.mxu0 0.0
    %300 = vmatprep.subr.mxu0 0.0
    %301 = vmatpush2.msra.mxu0 0.0
    %302 = vmatprep.subr.mxu0 0.0
    %303 = vmatpush2.msra.mxu0 0.0
    %304 = vmatprep.subr.mxu0 0.0
    %305 = vmatpush2.msra.mxu0 0.0
    %306 = vmatprep.subr.mxu0 0.0
    %307 = vmatpush2.msra.mxu0 0.0
    %308 = vmatprep.subr.mxu0 0.0
    %309 = vmatpush2.msra.mxu0 0.0
    %310 = vmatprep.subr.mxu0 0.0
    %311 = vmatpush2.msra.mxu0 0.0
    %312 = vmatprep.subr.mxu0 0.0
    %313 = vmatpush2.msra.mxu0 0.0
    %314 = vmatprep.subr.mxu0 0.0
    %315 = vmatpush2.msra.mxu0 0.0
    %316 = vmatprep.subr.mxu0 0.0
    %317 = vmatpush2.msra.mxu0 0.0
    %318 = vmatprep.mubr.f32.mxu0 0.0
    %319 = vmatmul.mubr.f32.gmra.mxu0 %v253
    %v320 = vpop.f32.mrf.mxu0
    %v321 = vadd.f32 0.0, %v320
    %v322 = vpop.f32.mrf.mxu0
    %323 = vdwg.mxu0
    %324 = vmatprep.subr.mxu0 0.0
    %325 = vmatpush1.msra.mxu0 0.0
    %326 = vmatprep.subr.mxu0 0.0
    %327 = vmatpush1.msra.mxu0 0.0
    %328 = vmatprep.subr.mxu0 0.0
    %329 = vmatpush1.msra.mxu0 0.0
    %330 = vmatprep.subr.mxu0 0.0
    %331 = vmatpush1.msra.mxu0 0.0
    %332 = vmatprep.subr.mxu0 0.0
    %333 = vmatpush1.msra.mxu0 0.0
    %334 = vmatprep.subr.mxu0 0.0
    %335 = vmatpush1.msra.mxu0 0.0
    %336 = vmatprep.subr.mxu0 0.0
    %337 = vmatpush1.msra.mxu0 0.0
    %338 = vmatprep.subr.mxu0 0.0
    %339 = vmatpush1.msra.mxu0 0.0
    %340 = vmatprep.subr.mxu0 0.0
    %341 = vmatpush1.msra.mxu0 0.0
    %342 = vmatprep.subr.mxu0 0.0
    %343 = vmatpush1.msra.mxu0 0.0
    %344 = vmatprep.subr.mxu0 0.0
    %345 = vmatpush1.msra.mxu0 0.0
    %346 = vmatprep.subr.mxu0 0.0
    %347 = vmatpush1.msra.mxu0 0.0
    %348 = vmatprep.subr.mxu0 0.0
    %349 = vmatpush1.msra.mxu0 0.0
    %350 = vmatprep.subr.mxu0 0.0
    %351 = vmatpush1.msra.mxu0 0.0
    %352 = vmatprep.subr.mxu0 0.0
    %353 = vmatpush1.msra.mxu0 0.0
    %354 = vmatprep.subr.mxu0 0.0
    %355 = vmatpush1.msra.mxu0 %v321
    %356 = vmatprep.subr.mxu0 0.0
    %357 = vmatpush2.msra.mxu0 0.0
    %358 = vmatprep.subr.mxu0 0.0
    %359 = vmatpush2.msra.mxu0 0.0
    %360 = vmatprep.subr.mxu0 0.0
    %361 = vmatpush2.msra.mxu0 0.0
    %362 = vmatprep.subr.mxu0 0.0
    %363 = vmatpush2.msra.mxu0 0.0
    %364 = vmatprep.subr.mxu0 0.0
    %365 = vmatpush2.msra.mxu0 0.0
    %366 = vmatprep.subr.mxu0 0.0
    %367 = vmatpush2.msra.mxu0 0.0
    %368 = vmatprep.subr.mxu0 0.0
    %369 = vmatpush2.msra.mxu0 0.0
    %370 = vmatprep.subr.mxu0 0.0
    %371 = vmatpush2.msra.mxu0 0.0
    %372 = vmatprep.subr.mxu0 0.0
    %373 = vmatpush2.msra.mxu0 0.0
    %374 = vmatprep.subr.mxu0 0.0
    %375 = vmatpush2.msra.mxu0 0.0
    %376 = vmatprep.subr.mxu0 0.0
    %377 = vmatpush2.msra.mxu0 0.0
    %378 = vmatprep.subr.mxu0 0.0
    %379 = vmatpush2.msra.mxu0 0.0
    %380 = vmatprep.subr.mxu0 0.0
    %381 = vmatpush2.msra.mxu0 0.0
    %382 = vmatprep.subr.mxu0 0.0
    %383 = vmatpush2.msra.mxu0 0.0
    %384 = vmatprep.subr.mxu0 0.0
    %385 = vmatpush2.msra.mxu0 0.0
    %386 = vmatprep.subr.mxu0 0.0
    %387 = vmatpush2.msra.mxu0 0.0
    %388 = vmatprep.mubr.f32.mxu0 0.0
    %389 = vmatmul.mubr.f32.gmra.mxu0 %v149
    %v390 = vpop.f32.mrf.mxu0
    %v391 = vadd.f32 %v130, %v390
    %v392 = vpop.f32.mrf.mxu0
    %393 = vmatprep.mubr.f32.mxu0 0.0
    %394 = vmatmul.mubr.f32.gmra.mxu0 %v152
    %v395 = vpop.f32.mrf.mxu0
    %v396 = vadd.f32 %v135, %v395
    %v397 = vpop.f32.mrf.mxu0
    %398 = vmatprep.mubr.f32.mxu0 0.0
    %399 = vmatmul.mubr.f32.gmra.mxu0 %v155
    %v400 = vpop.f32.mrf.mxu0
    %v401 = vadd.f32 %v140, %v400
    %v402 = vpop.f32.mrf.mxu0
    %403 = vmatprep.mubr.f32.mxu0 0.0
    %404 = vmatmul.mubr.f32.gmra.mxu0 %v158
    %v405 = vpop.f32.mrf.mxu0
    %v406 = vadd.f32 %v145, %v405
    %v407 = vpop.f32.mrf.mxu0
    %408 = vdwg.mxu0
    %v409 = vmax.f32 %v391, 0.0
    %v410 = vmax.f32 %v396, 0.0
    %v411 = vmax.f32 %v401, 0.0
    %v412 = vmax.f32 %v406, 0.0
    %413 = vst [vmem:[#allocation5 + $0x8] sm:$0xff] %v409
    %414 = vst [vmem:[#allocation5 + $0x18] sm:$0xff] %v410
    %415 = vst [vmem:[#allocation5 + $0x28] sm:$0xff] %v411
    %416 = vst [vmem:[#allocation5 + $0x38] sm:$0xff] %v412
    // Predicated region
    $region22: #{tpu_custom_call.1} parent=1 // pred_check
      _
    $region23: #{tpu_custom_call.1} parent=1 // pred_check_branch
      %418 = sbr.rel (0) target = $region25
    $region24: #{tpu_custom_call.1} parent=1 // pred_region
      %s420 = ssub.s32 1024, 1024
      %421 = vsyncadd [#allocation4], %s420
      %s422 = sshll.u32 [#allocation5], 4
      %s423 = int_to_ptr.vmem [resolvable:$true] %s422
      %428 = dma.vmem_to_hbm [thread:$0]  %s423, 1024, %s4, [#allocation4], 256, 256, 16
    $region25: #{tpu_custom_call.1} parent=1 // pred_fallthru
      _
    // Predicated region
    $region26: #{tpu_custom_call.1} parent=1 // pred_check
      _
    $region27: #{tpu_custom_call.1} parent=1 // pred_check_branch
      %430 = sbr.rel (0) target = $region29
    $region28: #{tpu_custom_call.1} parent=1 // pred_region
      %431 = dma.done [#allocation4], 1024
    $region29: #{tpu_custom_call.1} parent=1 // pred_fallthru
      _
    %432 = vsyncpa [#allocation3], 1
    %433 = vsyncpa [#allocation4], 1

</llo_original>
